<compile_context>
chip_gen: v6e
topology: v6e:2x2x1
jax: 0.10.0
libtpu: 0.0.40
codegen_flags: <defaults>
</compile_context>

<pallas_src>
import jax
import jax.numpy as jnp
from jax.experimental import pallas as pl
from jax.experimental.pallas import tpu as pltpu

IN_DIM = 28 * 28          # 784
HID_DIM = 256
OUT_DIM = 10


def _round_up(a, m):
    return (a + m - 1) // m * m


def _pick_tb(B, tb_max):
    """Batch-tile size.

    * B <= 16: one tile equal to the full batch dim (always a legal block).
    * Otherwise: >=2 tiles (so both TensorCores get work on v7x; an extra
      grid step is ~0.35us -> negligible on single-TC chips), tiles a
      multiple of 16 (bf16 sublane packing), as large as tb_max allows.
      Ragged last tiles are masked by Pallas, so no batch padding is needed.
    """
    if B <= 16:
        return B
    n_tiles = max(2, pl.cdiv(B, tb_max))
    tb = _round_up(pl.cdiv(B, n_tiles), 16)
    return min(tb, tb_max)


def mlp_kernel(x_ref, w1_ref, b1_ref, w2_ref, b2_ref, o_ref, h_ref):
    # fc1: cast the f32 input tile to bf16 in VMEM (no HBM copy), MXU matmul
    # with f32 accumulation.
    h = jnp.dot(x_ref[...].astype(jnp.bfloat16), w1_ref[...],
                preferred_element_type=jnp.float32)
    # Bias + ReLU in f32 on the VPU; stage the activation in bf16 scratch so
    # the (TB, 256) intermediate doesn't round-trip VMEM in f32.
    h_ref[...] = jnp.maximum(h + b1_ref[...], 0.0).astype(jnp.bfloat16)
    # fc2: bf16 x bf16 -> f32 accumulate, bias in f32, store the true (TB, 10).
    out = jnp.dot(h_ref[...], w2_ref[...], preferred_element_type=jnp.float32)
    o_ref[...] = (out + b2_ref[...]).astype(o_ref.dtype)


def mlp_forward(x, w1, b1, w2, b2, *, tb_max=2048):
    """x: (B, 784) f32.  w1: (784, 256), b1: (1, 256), w2: (256, 10), b2: (1, 10)."""
    B = x.shape[0]
    TB = _pick_tb(B, tb_max)
    grid = (pl.cdiv(B, TB),)

    # Weights in bf16 (native MXU dtype, halves their HBM read; tiny arrays so
    # the cast itself is negligible).  Biases stay f32.
    w1_b = w1.astype(jnp.bfloat16)
    w2_b = w2.astype(jnp.bfloat16)
    b1_f = b1.reshape(1, HID_DIM).astype(jnp.float32)
    b2_f = b2.reshape(1, OUT_DIM).astype(jnp.float32)

    cost = pl.CostEstimate(
        flops=2 * B * (IN_DIM * HID_DIM + HID_DIM * OUT_DIM),
        transcendentals=0,
        bytes_accessed=(x.size * 4 + w1_b.size * 2 + w2_b.size * 2
                        + b1_f.size * 4 + b2_f.size * 4
                        + B * OUT_DIM * 4),
    )

    # TODO(synk): if profiling on v7x shows "parallel" not sharding the batch
    # axis across the two TensorCores, switch to pltpu.CORE_PARALLEL.
    out = pl.pallas_call(
        mlp_kernel,
        out_shape=jax.ShapeDtypeStruct((B, OUT_DIM), jnp.float32),
        grid_spec=pltpu.PrefetchScalarGridSpec(
            num_scalar_prefetch=0,
            grid=grid,
            in_specs=[
                # x tile marches over the batch (double-buffered by Pallas);
                # full-extent 784 last dim, f32 straight from HBM.
                pl.BlockSpec((TB, IN_DIM), lambda i: (i, 0)),
                # Weights / biases: constant index_map -> resident in VMEM
                # across grid steps (no re-DMA).
                pl.BlockSpec((IN_DIM, HID_DIM), lambda i: (0, 0)),
                pl.BlockSpec((1, HID_DIM), lambda i: (0, 0)),
                pl.BlockSpec((HID_DIM, OUT_DIM), lambda i: (0, 0)),
                pl.BlockSpec((1, OUT_DIM), lambda i: (0, 0)),
            ],
            out_specs=pl.BlockSpec((TB, OUT_DIM), lambda i: (i, 0)),
            scratch_shapes=[pltpu.VMEM((TB, HID_DIM), jnp.bfloat16)],
        ),
        compiler_params=pltpu.CompilerParams(
            dimension_semantics=("parallel",),   # shards batch tiles across TCs on v7x
            vmem_limit_bytes=32 << 20,           # headroom for TB=2048 f32 x-tiles (v5e default is 16 MiB)
        ),
        cost_estimate=cost,
    )(x, w1_b, b1_f, w2_b, b2_f)

    return out


def init_params(key):
    """Deterministic init mimicking nn.Linear's uniform(-1/sqrt(fan_in), ...)."""
    k1, k2, k3, k4 = jax.random.split(key, 4)
    lim1 = 1.0 / jnp.sqrt(jnp.float32(IN_DIM))
    lim2 = 1.0 / jnp.sqrt(jnp.float32(HID_DIM))
    # Stored transposed relative to PyTorch: (in, out)
    w1 = jax.random.uniform(k1, (IN_DIM, HID_DIM), jnp.float32, -lim1, lim1)
    b1 = jax.random.uniform(k2, (1, HID_DIM), jnp.float32, -lim1, lim1)
    w2 = jax.random.uniform(k3, (HID_DIM, OUT_DIM), jnp.float32, -lim2, lim2)
    b2 = jax.random.uniform(k4, (1, OUT_DIM), jnp.float32, -lim2, lim2)
    return w1, b1, w2, b2


def reference_forward(x, w1, b1, w2, b2):
    h = jnp.maximum(
        jnp.dot(x, w1, precision=jax.lax.Precision.HIGHEST) + b1, 0.0)
    return jnp.dot(h, w2, precision=jax.lax.Precision.HIGHEST) + b2


if __name__ == "__main__":
    key = jax.random.PRNGKey(0)
    kx, kp = jax.random.split(key)

    B = 2
    x = jax.random.normal(kx, (B, IN_DIM), dtype=jnp.float32)
    w1, b1, w2, b2 = init_params(kp)

    out = mlp_forward(x, w1, b1, w2, b2)
    out = jax.block_until_ready(out)

    ref = reference_forward(x, w1, b1, w2, b2)
    assert out.shape == (B, OUT_DIM)
    # bf16 weights/activations (f32 accumulate) -> loosened tolerance vs f32 ref.
    assert jnp.allclose(out, ref, atol=3e-2, rtol=3e-2), (
        f"max abs err {jnp.max(jnp.abs(out - ref))}")

    print("KERNEL_OK")
</pallas_src>

<mosaic_0001>
module attributes {stable_mosaic.version = 11 : i64} {
  func.func @mlp_kernel(%arg0: i32, %arg1: memref<2x784xf32, #tpu.memory_space<vmem>>, %arg2: memref<784x256xbf16, #tpu.memory_space<vmem>>, %arg3: memref<1x256xf32, #tpu.memory_space<vmem>>, %arg4: memref<256x10xbf16, #tpu.memory_space<vmem>>, %arg5: memref<1x10xf32, #tpu.memory_space<vmem>>, %arg6: memref<2x10xf32, #tpu.memory_space<vmem>>, %arg7: memref<2x256xbf16, #tpu.memory_space<vmem>>) attributes {dimension_semantics = [#tpu.dimension_semantics<parallel>], iteration_bounds = array<i64: 1>, scalar_prefetch = 0 : i64, scratch_operands = 1 : i64, tpu.core_type = #tpu.core_type<tc>, window_params = [{transform_indices = @transform_0, window_bounds = array<i64: 2, 784>}, {pipeline_mode = #tpu.pipeline_mode<synchronous>, transform_indices = @transform_1, window_bounds = array<i64: 784, 256>}, {pipeline_mode = #tpu.pipeline_mode<synchronous>, transform_indices = @transform_2, window_bounds = array<i64: 1, 256>}, {pipeline_mode = #tpu.pipeline_mode<synchronous>, transform_indices = @transform_3, window_bounds = array<i64: 256, 10>}, {pipeline_mode = #tpu.pipeline_mode<synchronous>, transform_indices = @transform_4, window_bounds = array<i64: 1, 10>}, {transform_indices = @transform_5, window_bounds = array<i64: 2, 10>}]} {
    %c0 = arith.constant 0 : index
    %c0_0 = arith.constant 0 : index
    %0 = vector.load %arg1[%c0, %c0_0] : memref<2x784xf32, #tpu.memory_space<vmem>>, vector<2x784xf32>
    %1 = arith.truncf %0 : vector<2x784xf32> to vector<2x784xbf16>
    %c0_1 = arith.constant 0 : index
    %c0_2 = arith.constant 0 : index
    %2 = vector.load %arg2[%c0_1, %c0_2] : memref<784x256xbf16, #tpu.memory_space<vmem>>, vector<784x256xbf16>
    %cst = arith.constant dense<0.000000e+00> : vector<2x256xf32>
    %3 = tpu.matmul %1, %2, %cst {dimension_numbers = #tpu.dot_dimension_numbers<[1], [0], [0], [1], [0, 0, 1, 1], [], []>} : vector<2x784xbf16>, vector<784x256xbf16>, vector<2x256xf32> -> vector<2x256xf32>
    %c0_3 = arith.constant 0 : index
    %c0_4 = arith.constant 0 : index
    %4 = vector.load %arg3[%c0_3, %c0_4] : memref<1x256xf32, #tpu.memory_space<vmem>>, vector<1x256xf32>
    %5 = vector.broadcast %4 : vector<1x256xf32> to vector<2x256xf32>
    %6 = arith.addf %3, %5 : vector<2x256xf32>
    %cst_5 = arith.constant 0.000000e+00 : f32
    %7 = vector.broadcast %cst_5 : f32 to vector<2x256xf32>
    %8 = arith.maximumf %6, %7 : vector<2x256xf32>
    %9 = arith.truncf %8 : vector<2x256xf32> to vector<2x256xbf16>
    %c0_6 = arith.constant 0 : index
    %c0_7 = arith.constant 0 : index
    %10 = vector.load %arg7[%c0_6, %c0_7] : memref<2x256xbf16, #tpu.memory_space<vmem>>, vector<2x256xbf16>
    tpu.vector_store %arg7[%c0_6, %c0_7], %9 {strides = array<i32>} : memref<2x256xbf16, #tpu.memory_space<vmem>>, vector<2x256xbf16>,
    %c0_8 = arith.constant 0 : index
    %c0_9 = arith.constant 0 : index
    %11 = vector.load %arg7[%c0_8, %c0_9] : memref<2x256xbf16, #tpu.memory_space<vmem>>, vector<2x256xbf16>
    %c0_10 = arith.constant 0 : index
    %c0_11 = arith.constant 0 : index
    %12 = vector.load %arg4[%c0_10, %c0_11] : memref<256x10xbf16, #tpu.memory_space<vmem>>, vector<256x10xbf16>
    %cst_12 = arith.constant dense<0.000000e+00> : vector<2x10xf32>
    %13 = tpu.matmul %11, %12, %cst_12 {dimension_numbers = #tpu.dot_dimension_numbers<[1], [0], [0], [1], [0, 0, 1, 1], [], []>} : vector<2x256xbf16>, vector<256x10xbf16>, vector<2x10xf32> -> vector<2x10xf32>
    %c0_13 = arith.constant 0 : index
    %c0_14 = arith.constant 0 : index
    %14 = vector.load %arg5[%c0_13, %c0_14] : memref<1x10xf32, #tpu.memory_space<vmem>>, vector<1x10xf32>
    %15 = vector.broadcast %14 : vector<1x10xf32> to vector<2x10xf32>
    %16 = arith.addf %13, %15 : vector<2x10xf32>
    %c0_15 = arith.constant 0 : index
    %c0_16 = arith.constant 0 : index
    %17 = vector.load %arg6[%c0_15, %c0_16] : memref<2x10xf32, #tpu.memory_space<vmem>>, vector<2x10xf32>
    tpu.vector_store %arg6[%c0_15, %c0_16], %16 {strides = array<i32>} : memref<2x10xf32, #tpu.memory_space<vmem>>, vector<2x10xf32>,
    return
  }
  func.func @transform_0(%arg0: i32) -> (i32, i32) {
    %c0_i32 = arith.constant 0 : i32
    %c0_i32_0 = arith.constant 0 : i32
    return %arg0, %c0_i32 : i32, i32
  }
  func.func @transform_1(%arg0: i32) -> (i32, i32) {
    %c0_i32 = arith.constant 0 : i32
    %c0_i32_0 = arith.constant 0 : i32
    %c0_i32_1 = arith.constant 0 : i32
    return %c0_i32, %c0_i32_0 : i32, i32
  }
  func.func @transform_2(%arg0: i32) -> (i32, i32) {
    %c0_i32 = arith.constant 0 : i32
    %c0_i32_0 = arith.constant 0 : i32
    %c0_i32_1 = arith.constant 0 : i32
    return %c0_i32, %c0_i32_0 : i32, i32
  }
  func.func @transform_3(%arg0: i32) -> (i32, i32) {
    %c0_i32 = arith.constant 0 : i32
    %c0_i32_0 = arith.constant 0 : i32
    %c0_i32_1 = arith.constant 0 : i32
    return %c0_i32, %c0_i32_0 : i32, i32
  }
  func.func @transform_4(%arg0: i32) -> (i32, i32) {
    %c0_i32 = arith.constant 0 : i32
    %c0_i32_0 = arith.constant 0 : i32
    %c0_i32_1 = arith.constant 0 : i32
    return %c0_i32, %c0_i32_0 : i32, i32
  }
  func.func @transform_5(%arg0: i32) -> (i32, i32) {
    %c0_i32 = arith.constant 0 : i32
    %c0_i32_0 = arith.constant 0 : i32
    return %arg0, %c0_i32 : i32, i32
  }
}

</mosaic_0001>

<llo_original>
// kernel: tpu_custom_call.1
$region0: #{tpu_custom_call.1}
  #allocation0 [shape = 'u32[]', space=smem, size = 0x4, offset = 0x4, fixed_abs, tag = 'smem constant byte address 0x4 - core index']
  #allocation1 [shape = 'u32[144,128]{1,0:T(1,128)}', space=vmem, size = 0x12000, scoped, tag = 'internal scratch']
  #allocation2 [shape = 'bf16[2,256]{1,0:T(2,128)(2,1)}', space=vmem, size = 0x400, scoped, tag = 'scratch operand']
  %s0 = inlined_call_operand.vmem [shape: f32[2,784], index: 0, kind: input, shape index: {}]
  %s1 = inlined_call_operand.hbm [shape: bf16[784,256], index: 1, kind: input, shape index: {}]
  %s2 = inlined_call_operand.vmem [shape: f32[1,256], index: 2, kind: input, shape index: {}]
  %s3 = inlined_call_operand.vmem [shape: bf16[256,10], index: 3, kind: input, shape index: {}]
  %s4 = inlined_call_operand.vmem [shape: f32[1,10], index: 4, kind: input, shape index: {}]
  %s5 = inlined_call_operand.hbm [shape: f32[2,10], index: 5, kind: output, shape index: {}]
  %s6 = sld [smem:[#allocation0]]
  $region34: #{tpu_custom_call.1} parent=0
    _
  %s8 = ssub.s32 1, %s6
  %s9 = scalar_select 0, %s8, %s6
  $region1: #{tpu_custom_call.1} parent=0
    #allocation3 [shape = 'u8[401408]{0}', space=vmem, size = 0x62000, scoped, tag = 'input window, operand 1, single buffered']
    #allocation4 [shape = 's32[1]{0}', space=sflag, size = 0x4, scoped, tag = 'scoped memory for tpu_custom_call.1']
    #allocation5 [shape = 's32[1]{0}', space=sflag, size = 0x4, scoped, tag = 'scoped memory for tpu_custom_call.1']
    #allocation6 [shape = 'u8[1024]{0}', space=vmem, size = 0x400, scoped, tag = 'output window, operand 0, single buffered']
    %10 = vsyncpa [#allocation4], 0
    %11 = vsyncpa [#allocation5], 0
    // Predicated region
    $region2: #{tpu_custom_call.1} parent=1 // pred_check
      _
    $region3: #{tpu_custom_call.1} parent=1 // pred_check_branch
      %13 = sbr.rel (0) target = $region5
    $region4: #{tpu_custom_call.1} parent=1 // pred_region
      _
    $region5: #{tpu_custom_call.1} parent=1 // pred_fallthru
      _
    // Predicated region
    $region6: #{tpu_custom_call.1} parent=1 // pred_check
      _
    $region7: #{tpu_custom_call.1} parent=1 // pred_check_branch
      %15 = sbr.rel (0) target = $region9
    $region8: #{tpu_custom_call.1} parent=1 // pred_region
      %s17 = ssub.s32 12544, 12544
      %18 = vsyncadd [#allocation4], %s17
      %s19 = sshll.u32 [#allocation3], 4
      %s20 = int_to_ptr.vmem [resolvable:$true] %s19
      %25 = dma.hbm_to_vmem [thread:$0]  %s1, 12544, %s20, [#allocation4], 128, 128, 8
    $region9: #{tpu_custom_call.1} parent=1 // pred_fallthru
      _
    // Predicated region
    $region10: #{tpu_custom_call.1} parent=1 // pred_check
      _
    $region11: #{tpu_custom_call.1} parent=1 // pred_check_branch
      %27 = sbr.rel (0) target = $region13
    $region12: #{tpu_custom_call.1} parent=1 // pred_region
      _
    $region13: #{tpu_custom_call.1} parent=1 // pred_fallthru
      _
    // Predicated region
    $region14: #{tpu_custom_call.1} parent=1 // pred_check
      _
    $region15: #{tpu_custom_call.1} parent=1 // pred_check_branch
      %29 = sbr.rel (0) target = $region17
    $region16: #{tpu_custom_call.1} parent=1 // pred_region
      _
    $region17: #{tpu_custom_call.1} parent=1 // pred_fallthru
      _
    // Predicated region
    $region18: #{tpu_custom_call.1} parent=1 // pred_check
      _
    $region19: #{tpu_custom_call.1} parent=1 // pred_check_branch
      %31 = sbr.rel (0) target = $region21
    $region20: #{tpu_custom_call.1} parent=1 // pred_region
      _
    $region21: #{tpu_custom_call.1} parent=1 // pred_fallthru
      _
    // Predicated region
    $region22: #{tpu_custom_call.1} parent=1 // pred_check
      _
    $region23: #{tpu_custom_call.1} parent=1 // pred_check_branch
      %33 = sbr.rel (0) target = $region25
    $region24: #{tpu_custom_call.1} parent=1 // pred_region
      %34 = dma.done [#allocation4], 12544
    $region25: #{tpu_custom_call.1} parent=1 // pred_fallthru
      _
    %v36 = vld [vmem:[%s0] sm:$0xff]
    %v37 = vld [vmem:[%s0 + $0x8] sm:$0x3f]
    %v40 = vcombine.high %v36, %v36
    %v42 = vunpack.c.l.s4 1983009808
    %v43 = vunpack.c.0.s8 %v42
    %v44 = vlaneseq
    %v45 = vshrl.u32 %v44, 7
    %v46 = vsub.s32 %v43, %v45
    %v47 = vrot.slane %v36, %v46
    %v49 = vunpack.c.l.s4 1983009808
    %v50 = vunpack.c.0.s8 %v49
    %v51 = vlaneseq
    %v52 = vshrl.u32 %v51, 7
    %v53 = vsub.s32 %v50, %v52
    %v54 = vrot.slane %v40, %v53
    %v55 = vcombine.high %v47, %v47
    %v56 = vcombine.high %v54, %v54
    %v57 = vcombine.high %v37, %v37
    %v59 = vunpack.c.l.s4 1983009808
    %v60 = vunpack.c.0.s8 %v59
    %v61 = vlaneseq
    %v62 = vshrl.u32 %v61, 7
    %v63 = vsub.s32 %v60, %v62
    %v64 = vrot.slane %v37, %v63
    %v66 = vunpack.c.l.s4 1983009808
    %v67 = vunpack.c.0.s8 %v66
    %v68 = vlaneseq
    %v69 = vshrl.u32 %v68, 7
    %v70 = vsub.s32 %v67, %v69
    %v71 = vrot.slane %v57, %v70
    %v72 = vcombine.high %v64, %v64
    %v80 = vpack.c.bf16 %v47, %v47
    %v81 = vpack.c.bf16 %v55, %v55
    %v82 = vpack.c.bf16 %v54, %v54
    %v83 = vpack.c.bf16 %v56, %v56
    %v84 = vpack.c.bf16 %v64, %v64
    %v85 = vpack.c.bf16 %v72, %v72
    %v86 = vpack.c.bf16 %v71, %v71
    %v87 = vld [vmem:[#allocation3] sm:$0xff]
    %v88 = vld [vmem:[#allocation3 + $0x8] sm:$0xff]
    %v89 = vld [vmem:[#allocation3 + $0x10] sm:$0xff]
    %v90 = vld [vmem:[#allocation3 + $0x18] sm:$0xff]
    %v91 = vld [vmem:[#allocation3 + $0x20] sm:$0xff]
    %v92 = vld [vmem:[#allocation3 + $0x28] sm:$0xff]
    %v93 = vld [vmem:[#allocation3 + $0x30] sm:$0xff]
    %v94 = vld [vmem:[#allocation3 + $0x38] sm:$0xff]
    %v95 = vld [vmem:[#allocation3 + $0x40] sm:$0xff]
    %v96 = vld [vmem:[#allocation3 + $0x48] sm:$0xff]
    %v97 = vld [vmem:[#allocation3 + $0x50] sm:$0xff]
    %v98 = vld [vmem:[#allocation3 + $0x58] sm:$0xff]
    %v99 = vld [vmem:[#allocation3 + $0x60] sm:$0xff]
    %v100 = vld [vmem:[#allocation3 + $0x68] sm:$0xff]
    %v101 = vld [vmem:[#allocation3 + $0x70] sm:$0xff]
    %v102 = vld [vmem:[#allocation3 + $0x78] sm:$0xff]
    %v103 = vld [vmem:[#allocation3 + $0x80] sm:$0xff]
    %v104 = vld [vmem:[#allocation3 + $0x88] sm:$0xff]
    %v105 = vld [vmem:[#allocation3 + $0x90] sm:$0xff]
    %v106 = vld [vmem:[#allocation3 + $0x98] sm:$0xff]
    %v107 = vld [vmem:[#allocation3 + $0xa0] sm:$0xff]
    %v108 = vld [vmem:[#allocation3 + $0xa8] sm:$0xff]
    %v109 = vld [vmem:[#allocation3 + $0xb0] sm:$0xff]
    %v110 = vld [vmem:[#allocation3 + $0xb8] sm:$0xff]
    %v111 = vld [vmem:[#allocation3 + $0xc0] sm:$0xff]
    %v112 = vld [vmem:[#allocation3 + $0xc8] sm:$0xff]
    %v113 = vld [vmem:[#allocation3 + $0xd0] sm:$0xff]
    %v114 = vld [vmem:[#allocation3 + $0xd8] sm:$0xff]
    %v115 = vld [vmem:[#allocation3 + $0xe0] sm:$0xff]
    %v116 = vld [vmem:[#allocation3 + $0xe8] sm:$0xff]
    %v117 = vld [vmem:[#allocation3 + $0xf0] sm:$0xff]
    %v118 = vld [vmem:[#allocation3 + $0xf8] sm:$0xff]
    %v119 = vld [vmem:[#allocation3 + $0x100] sm:$0xff]
    %v120 = vld [vmem:[#allocation3 + $0x108] sm:$0xff]
    %v121 = vld [vmem:[#allocation3 + $0x110] sm:$0xff]
    %v122 = vld [vmem:[#allocation3 + $0x118] sm:$0xff]
    %v123 = vld [vmem:[#allocation3 + $0x120] sm:$0xff]
    %v124 = vld [vmem:[#allocation3 + $0x128] sm:$0xff]
    %v125 = vld [vmem:[#allocation3 + $0x130] sm:$0xff]
    %v126 = vld [vmem:[#allocation3 + $0x138] sm:$0xff]
    %v127 = vld [vmem:[#allocation3 + $0x140] sm:$0xff]
    %v128 = vld [vmem:[#allocation3 + $0x148] sm:$0xff]
    %v129 = vld [vmem:[#allocation3 + $0x150] sm:$0xff]
    %v130 = vld [vmem:[#allocation3 + $0x158] sm:$0xff]
    %v131 = vld [vmem:[#allocation3 + $0x160] sm:$0xff]
    %v132 = vld [vmem:[#allocation3 + $0x168] sm:$0xff]
    %v133 = vld [vmem:[#allocation3 + $0x170] sm:$0xff]
    %v134 = vld [vmem:[#allocation3 + $0x178] sm:$0xff]
    %v135 = vld [vmem:[#allocation3 + $0x180] sm:$0xff]
    %v136 = vld [vmem:[#allocation3 + $0x188] sm:$0xff]
    %v137 = vld [vmem:[#allocation3 + $0x190] sm:$0xff]
    %v138 = vld [vmem:[#allocation3 + $0x198] sm:$0xff]
    %v139 = vld [vmem:[#allocation3 + $0x1a0] sm:$0xff]
    %v140 = vld [vmem:[#allocation3 + $0x1a8] sm:$0xff]
    %v141 = vld [vmem:[#allocation3 + $0x1b0] sm:$0xff]
    %v142 = vld [vmem:[#allocation3 + $0x1b8] sm:$0xff]
    %v143 = vld [vmem:[#allocation3 + $0x1c0] sm:$0xff]
    %v144 = vld [vmem:[#allocation3 + $0x1c8] sm:$0xff]
    %v145 = vld [vmem:[#allocation3 + $0x1d0] sm:$0xff]
    %v146 = vld [vmem:[#allocation3 + $0x1d8] sm:$0xff]
    %v147 = vld [vmem:[#allocation3 + $0x1e0] sm:$0xff]
    %v148 = vld [vmem:[#allocation3 + $0x1e8] sm:$0xff]
    %v149 = vld [vmem:[#allocation3 + $0x1f0] sm:$0xff]
    %v150 = vld [vmem:[#allocation3 + $0x1f8] sm:$0xff]
    %v151 = vld [vmem:[#allocation3 + $0x200] sm:$0xff]
    %v152 = vld [vmem:[#allocation3 + $0x208] sm:$0xff]
    %v153 = vld [vmem:[#allocation3 + $0x210] sm:$0xff]
    %v154 = vld [vmem:[#allocation3 + $0x218] sm:$0xff]
    %v155 = vld [vmem:[#allocation3 + $0x220] sm:$0xff]
    %v156 = vld [vmem:[#allocation3 + $0x228] sm:$0xff]
    %v157 = vld [vmem:[#allocation3 + $0x230] sm:$0xff]
    %v158 = vld [vmem:[#allocation3 + $0x238] sm:$0xff]
    %v159 = vld [vmem:[#allocation3 + $0x240] sm:$0xff]
    %v160 = vld [vmem:[#allocation3 + $0x248] sm:$0xff]
    %v161 = vld [vmem:[#allocation3 + $0x250] sm:$0xff]
    %v162 = vld [vmem:[#allocation3 + $0x258] sm:$0xff]
    %v163 = vld [vmem:[#allocation3 + $0x260] sm:$0xff]
    %v164 = vld [vmem:[#allocation3 + $0x268] sm:$0xff]
    %v165 = vld [vmem:[#allocation3 + $0x270] sm:$0xff]
    %v166 = vld [vmem:[#allocation3 + $0x278] sm:$0xff]
    %v167 = vld [vmem:[#allocation3 + $0x280] sm:$0xff]
    %v168 = vld [vmem:[#allocation3 + $0x288] sm:$0xff]
    %v169 = vld [vmem:[#allocation3 + $0x290] sm:$0xff]
    %v170 = vld [vmem:[#allocation3 + $0x298] sm:$0xff]
    %v171 = vld [vmem:[#allocation3 + $0x2a0] sm:$0xff]
    %v172 = vld [vmem:[#allocation3 + $0x2a8] sm:$0xff]
    %v173 = vld [vmem:[#allocation3 + $0x2b0] sm:$0xff]
    %v174 = vld [vmem:[#allocation3 + $0x2b8] sm:$0xff]
    %v175 = vld [vmem:[#allocation3 + $0x2c0] sm:$0xff]
    %v176 = vld [vmem:[#allocation3 + $0x2c8] sm:$0xff]
    %v177 = vld [vmem:[#allocation3 + $0x2d0] sm:$0xff]
    %v178 = vld [vmem:[#allocation3 + $0x2d8] sm:$0xff]
    %v179 = vld [vmem:[#allocation3 + $0x2e0] sm:$0xff]
    %v180 = vld [vmem:[#allocation3 + $0x2e8] sm:$0xff]
    %v181 = vld [vmem:[#allocation3 + $0x2f0] sm:$0xff]
    %v182 = vld [vmem:[#allocation3 + $0x2f8] sm:$0xff]
    %v183 = vld [vmem:[#allocation3 + $0x300] sm:$0xff]
    %v184 = vld [vmem:[#allocation3 + $0x308] sm:$0xff]
    %v185 = vld [vmem:[%s2] sm:$0x3]
    %v187 = vlaneseq
    %v188 = vshrl.u32 %v187, 7
    %v189 = vsub.s32 0, %v188
    %v190 = vrot.slane %v185, %v189
    %v191 = vlaneseq
    %v192 = vshrl.u32 %v191, 7
    %v193 = vsub.s32 1, %v192
    %v194 = vrot.slane %v185, %v193
    %v295 = vunpack.c.l.b16 %v87
    %v296 = vunpack.c.h.b16 %v87
    %v297 = vunpack.c.l.b16 %v88
    %v298 = vunpack.c.h.b16 %v88
    %v299 = vunpack.c.l.b16 %v89
    %v300 = vunpack.c.h.b16 %v89
    %v301 = vunpack.c.l.b16 %v90
    %v302 = vunpack.c.h.b16 %v90
    %v303 = vunpack.c.l.b16 %v91
    %v304 = vunpack.c.h.b16 %v91
    %v305 = vunpack.c.l.b16 %v92
    %v306 = vunpack.c.h.b16 %v92
    %v307 = vunpack.c.l.b16 %v93
    %v308 = vunpack.c.h.b16 %v93
    %v309 = vunpack.c.l.b16 %v94
    %v310 = vunpack.c.h.b16 %v94
    %v311 = vunpack.c.l.b16 %v95
    %v312 = vunpack.c.h.b16 %v95
    %v313 = vunpack.c.l.b16 %v96
    %v314 = vunpack.c.h.b16 %v96
    %v315 = vunpack.c.l.b16 %v97
    %v316 = vunpack.c.h.b16 %v97
    %v317 = vunpack.c.l.b16 %v98
    %v318 = vunpack.c.h.b16 %v98
    %v319 = vunpack.c.l.b16 %v99
    %v320 = vunpack.c.h.b16 %v99
    %v321 = vunpack.c.l.b16 %v100
    %v322 = vunpack.c.h.b16 %v100
    %v323 = vunpack.c.l.b16 %v101
    %v324 = vunpack.c.h.b16 %v101
    %v325 = vunpack.c.l.b16 %v102
    %v326 = vunpack.c.h.b16 %v102
    %v327 = vunpack.c.l.b16 %v103
    %v328 = vunpack.c.h.b16 %v103
    %v329 = vunpack.c.l.b16 %v104
    %v330 = vunpack.c.h.b16 %v104
    %v331 = vunpack.c.l.b16 %v105
    %v332 = vunpack.c.h.b16 %v105
    %v333 = vunpack.c.l.b16 %v106
    %v334 = vunpack.c.h.b16 %v106
    %v335 = vunpack.c.l.b16 %v107
    %v336 = vunpack.c.h.b16 %v107
    %v337 = vunpack.c.l.b16 %v108
    %v338 = vunpack.c.h.b16 %v108
    %v339 = vunpack.c.l.b16 %v109
    %v340 = vunpack.c.h.b16 %v109
    %v341 = vunpack.c.l.b16 %v110
    %v342 = vunpack.c.h.b16 %v110
    %v343 = vunpack.c.l.b16 %v111
    %v344 = vunpack.c.h.b16 %v111
    %v345 = vunpack.c.l.b16 %v112
    %v346 = vunpack.c.h.b16 %v112
    %v347 = vunpack.c.l.b16 %v113
    %v348 = vunpack.c.h.b16 %v113
    %v349 = vunpack.c.l.b16 %v114
    %v350 = vunpack.c.h.b16 %v114
    %v351 = vunpack.c.l.b16 %v115
    %v352 = vunpack.c.h.b16 %v115
    %v353 = vunpack.c.l.b16 %v116
    %v354 = vunpack.c.h.b16 %v116
    %v355 = vunpack.c.l.b16 %v117
    %v356 = vunpack.c.h.b16 %v117
    %v357 = vunpack.c.l.b16 %v118
    %v358 = vunpack.c.h.b16 %v118
    %v359 = vunpack.c.l.b16 %v119
    %v360 = vunpack.c.h.b16 %v119
    %v361 = vunpack.c.l.b16 %v120
    %v362 = vunpack.c.h.b16 %v120
    %v363 = vunpack.c.l.b16 %v121
    %v364 = vunpack.c.h.b16 %v121
    %v365 = vunpack.c.l.b16 %v122
    %v366 = vunpack.c.h.b16 %v122
    %v367 = vunpack.c.l.b16 %v123
    %v368 = vunpack.c.h.b16 %v123
    %v369 = vunpack.c.l.b16 %v124
    %v370 = vunpack.c.h.b16 %v124
    %v371 = vunpack.c.l.b16 %v125
    %v372 = vunpack.c.h.b16 %v125
    %v373 = vunpack.c.l.b16 %v126
    %v374 = vunpack.c.h.b16 %v126
    %v375 = vunpack.c.l.b16 %v127
    %v376 = vunpack.c.h.b16 %v127
    %v377 = vunpack.c.l.b16 %v128
    %v378 = vunpack.c.h.b16 %v128
    %v379 = vunpack.c.l.b16 %v129
    %v380 = vunpack.c.h.b16 %v129
    %v381 = vunpack.c.l.b16 %v130
    %v382 = vunpack.c.h.b16 %v130
    %v383 = vunpack.c.l.b16 %v131
    %v384 = vunpack.c.h.b16 %v131
    %v385 = vunpack.c.l.b16 %v132
    %v386 = vunpack.c.h.b16 %v132
    %v387 = vunpack.c.l.b16 %v133
    %v388 = vunpack.c.h.b16 %v133
    %v389 = vunpack.c.l.b16 %v134
    %v390 = vunpack.c.h.b16 %v134
    %v391 = vunpack.c.l.b16 %v135
    %v392 = vunpack.c.h.b16 %v135
    %v393 = vunpack.c.l.b16 %v136
    %v394 = vunpack.c.h.b16 %v136
    %v395 = vunpack.c.l.b16 %v137
    %v396 = vunpack.c.h.b16 %v137
    %v397 = vunpack.c.l.b16 %v138
    %v398 = vunpack.c.h.b16 %v138
    %v399 = vunpack.c.l.b16 %v139
    %v400 = vunpack.c.h.b16 %v139
    %v401 = vunpack.c.l.b16 %v140
    %v402 = vunpack.c.h.b16 %v140
    %v403 = vunpack.c.l.b16 %v141
    %v404 = vunpack.c.h.b16 %v141
    %v405 = vunpack.c.l.b16 %v142
    %v406 = vunpack.c.h.b16 %v142
    %v407 = vunpack.c.l.b16 %v143
    %v408 = vunpack.c.h.b16 %v143
    %v409 = vunpack.c.l.b16 %v144
    %v410 = vunpack.c.h.b16 %v144
    %v411 = vunpack.c.l.b16 %v145
    %v412 = vunpack.c.h.b16 %v145
    %v413 = vunpack.c.l.b16 %v146
    %v414 = vunpack.c.h.b16 %v146
    %v415 = vunpack.c.l.b16 %v147
    %v416 = vunpack.c.h.b16 %v147
    %v417 = vunpack.c.l.b16 %v148
    %v418 = vunpack.c.h.b16 %v148
    %v419 = vunpack.c.l.b16 %v149
    %v420 = vunpack.c.h.b16 %v149
    %v421 = vunpack.c.l.b16 %v150
    %v422 = vunpack.c.h.b16 %v150
    %v423 = vunpack.c.l.b16 %v151
    %v424 = vunpack.c.h.b16 %v151
    %v425 = vunpack.c.l.b16 %v152
    %v426 = vunpack.c.h.b16 %v152
    %v427 = vunpack.c.l.b16 %v153
    %v428 = vunpack.c.h.b16 %v153
    %v429 = vunpack.c.l.b16 %v154
    %v430 = vunpack.c.h.b16 %v154
    %v431 = vunpack.c.l.b16 %v155
    %v432 = vunpack.c.h.b16 %v155
    %v433 = vunpack.c.l.b16 %v156
    %v434 = vunpack.c.h.b16 %v156
    %v435 = vunpack.c.l.b16 %v157
    %v436 = vunpack.c.h.b16 %v157
    %v437 = vunpack.c.l.b16 %v158
    %v438 = vunpack.c.h.b16 %v158
    %v439 = vunpack.c.l.b16 %v159
    %v440 = vunpack.c.h.b16 %v159
    %v441 = vunpack.c.l.b16 %v160
    %v442 = vunpack.c.h.b16 %v160
    %v443 = vunpack.c.l.b16 %v161
    %v444 = vunpack.c.h.b16 %v161
    %v445 = vunpack.c.l.b16 %v162
    %v446 = vunpack.c.h.b16 %v162
    %v447 = vunpack.c.l.b16 %v163
    %v448 = vunpack.c.h.b16 %v163
    %v449 = vunpack.c.l.b16 %v164
    %v450 = vunpack.c.h.b16 %v164
    %v451 = vunpack.c.l.b16 %v165
    %v452 = vunpack.c.h.b16 %v165
    %v453 = vunpack.c.l.b16 %v166
    %v454 = vunpack.c.h.b16 %v166
    %v455 = vunpack.c.l.b16 %v167
    %v456 = vunpack.c.h.b16 %v167
    %v457 = vunpack.c.l.b16 %v168
    %v458 = vunpack.c.h.b16 %v168
    %v459 = vunpack.c.l.b16 %v169
    %v460 = vunpack.c.h.b16 %v169
    %v461 = vunpack.c.l.b16 %v170
    %v462 = vunpack.c.h.b16 %v170
    %v463 = vunpack.c.l.b16 %v171
    %v464 = vunpack.c.h.b16 %v171
    %v465 = vunpack.c.l.b16 %v172
    %v466 = vunpack.c.h.b16 %v172
    %v467 = vunpack.c.l.b16 %v173
    %v468 = vunpack.c.h.b16 %v173
    %v469 = vunpack.c.l.b16 %v174
    %v470 = vunpack.c.h.b16 %v174
    %v471 = vunpack.c.l.b16 %v175
    %v472 = vunpack.c.h.b16 %v175
    %v473 = vunpack.c.l.b16 %v176
    %v474 = vunpack.c.h.b16 %v176
    %v475 = vunpack.c.l.b16 %v177
    %v476 = vunpack.c.h.b16 %v177
    %v477 = vunpack.c.l.b16 %v178
    %v478 = vunpack.c.h.b16 %v178
    %v479 = vunpack.c.l.b16 %v179
    %v480 = vunpack.c.h.b16 %v179
    %v481 = vunpack.c.l.b16 %v180
    %v482 = vunpack.c.h.b16 %v180
    %v483 = vunpack.c.l.b16 %v181
    %v484 = vunpack.c.h.b16 %v181
    %v485 = vunpack.c.l.b16 %v182
    %v486 = vunpack.c.h.b16 %v182
    %v487 = vunpack.c.l.b16 %v183
    %v488 = vunpack.c.h.b16 %v183
    %v489 = vunpack.c.l.b16 %v184
    %v490 = vunpack.c.h.b16 %v184
    %v491 = vpack.c.b16 %v297, %v295
    %v492 = vpack.c.b16 %v298, %v296
    %v493 = vpack.c.b16 %v301, %v299
    %v494 = vpack.c.b16 %v302, %v300
    %v495 = vpack.c.b16 %v305, %v303
    %v496 = vpack.c.b16 %v306, %v304
    %v497 = vpack.c.b16 %v309, %v307
    %v498 = vpack.c.b16 %v310, %v308
    %v499 = vpack.c.b16 %v313, %v311
    %v500 = vpack.c.b16 %v314, %v312
    %v501 = vpack.c.b16 %v317, %v315
    %v502 = vpack.c.b16 %v318, %v316
    %v503 = vpack.c.b16 %v321, %v319
    %v504 = vpack.c.b16 %v322, %v320
    %v505 = vpack.c.b16 %v325, %v323
    %v506 = vpack.c.b16 %v326, %v324
    %v507 = vpack.c.b16 %v329, %v327
    %v508 = vpack.c.b16 %v330, %v328
    %v509 = vpack.c.b16 %v333, %v331
    %v510 = vpack.c.b16 %v334, %v332
    %v511 = vpack.c.b16 %v337, %v335
    %v512 = vpack.c.b16 %v338, %v336
    %v513 = vpack.c.b16 %v341, %v339
    %v514 = vpack.c.b16 %v342, %v340
    %v515 = vpack.c.b16 %v345, %v343
    %v516 = vpack.c.b16 %v346, %v344
    %v517 = vpack.c.b16 %v349, %v347
    %v518 = vpack.c.b16 %v350, %v348
    %v519 = vpack.c.b16 %v353, %v351
    %v520 = vpack.c.b16 %v354, %v352
    %v521 = vpack.c.b16 %v357, %v355
    %v522 = vpack.c.b16 %v358, %v356
    %v523 = vpack.c.b16 %v361, %v359
    %v524 = vpack.c.b16 %v362, %v360
    %v525 = vpack.c.b16 %v365, %v363
    %v526 = vpack.c.b16 %v366, %v364
    %v527 = vpack.c.b16 %v369, %v367
    %v528 = vpack.c.b16 %v370, %v368
    %v529 = vpack.c.b16 %v373, %v371
    %v530 = vpack.c.b16 %v374, %v372
    %v531 = vpack.c.b16 %v377, %v375
    %v532 = vpack.c.b16 %v378, %v376
    %v533 = vpack.c.b16 %v381, %v379
    %v534 = vpack.c.b16 %v382, %v380
    %v535 = vpack.c.b16 %v385, %v383
    %v536 = vpack.c.b16 %v386, %v384
    %v537 = vpack.c.b16 %v389, %v387
    %v538 = vpack.c.b16 %v390, %v388
    %v539 = vpack.c.b16 %v393, %v391
    %v540 = vpack.c.b16 %v394, %v392
    %v541 = vpack.c.b16 %v397, %v395
    %v542 = vpack.c.b16 %v398, %v396
    %v543 = vpack.c.b16 %v401, %v399
    %v544 = vpack.c.b16 %v402, %v400
    %v545 = vpack.c.b16 %v405, %v403
    %v546 = vpack.c.b16 %v406, %v404
    %v547 = vpack.c.b16 %v409, %v407
    %v548 = vpack.c.b16 %v410, %v408
    %v549 = vpack.c.b16 %v413, %v411
    %v550 = vpack.c.b16 %v414, %v412
    %v551 = vpack.c.b16 %v417, %v415
    %v552 = vpack.c.b16 %v418, %v416
    %v553 = vpack.c.b16 %v421, %v419
    %v554 = vpack.c.b16 %v422, %v420
    %v555 = vpack.c.b16 %v425, %v423
    %v556 = vpack.c.b16 %v426, %v424
    %v557 = vpack.c.b16 %v429, %v427
    %v558 = vpack.c.b16 %v430, %v428
    %v559 = vpack.c.b16 %v433, %v431
    %v560 = vpack.c.b16 %v434, %v432
    %v561 = vpack.c.b16 %v437, %v435
    %v562 = vpack.c.b16 %v438, %v436
    %v563 = vpack.c.b16 %v441, %v439
    %v564 = vpack.c.b16 %v442, %v440
    %v565 = vpack.c.b16 %v445, %v443
    %v566 = vpack.c.b16 %v446, %v444
    %v567 = vpack.c.b16 %v449, %v447
    %v568 = vpack.c.b16 %v450, %v448
    %v569 = vpack.c.b16 %v453, %v451
    %v570 = vpack.c.b16 %v454, %v452
    %v571 = vpack.c.b16 %v457, %v455
    %v572 = vpack.c.b16 %v458, %v456
    %v573 = vpack.c.b16 %v461, %v459
    %v574 = vpack.c.b16 %v462, %v460
    %v575 = vpack.c.b16 %v465, %v463
    %v576 = vpack.c.b16 %v466, %v464
    %v577 = vpack.c.b16 %v469, %v467
    %v578 = vpack.c.b16 %v470, %v468
    %v579 = vpack.c.b16 %v473, %v471
    %v580 = vpack.c.b16 %v474, %v472
    %v581 = vpack.c.b16 %v477, %v475
    %v582 = vpack.c.b16 %v478, %v476
    %v583 = vpack.c.b16 %v481, %v479
    %v584 = vpack.c.b16 %v482, %v480
    %v585 = vpack.c.b16 %v485, %v483
    %v586 = vpack.c.b16 %v486, %v484
    %v587 = vpack.c.b16 %v489, %v487
    %v588 = vpack.c.b16 %v490, %v488
    %vm687 = vcmask 130048
    %v689 = vsel %vm687, %v86, 0
    %691 = vmatprep.subr.bf16.mxu0 %v506
    %692 = vmatpush1.bf16.msra.mxu0 %v505
    %693 = vmatprep.subr.bf16.mxu0 %v504
    %694 = vmatpush1.bf16.msra.mxu0 %v503
    %695 = vmatprep.subr.bf16.mxu0 %v502
    %696 = vmatpush1.bf16.msra.mxu0 %v501
    %697 = vmatprep.subr.bf16.mxu0 %v500
    %698 = vmatpush1.bf16.msra.mxu0 %v499
    %699 = vmatprep.subr.bf16.mxu0 %v498
    %700 = vmatpush1.bf16.msra.mxu0 %v497
    %701 = vmatprep.subr.bf16.mxu0 %v496
    %702 = vmatpush1.bf16.msra.mxu0 %v495
    %703 = vmatprep.subr.bf16.mxu0 %v494
    %704 = vmatpush1.bf16.msra.mxu0 %v493
    %705 = vmatprep.subr.bf16.mxu0 %v492
    %706 = vmatpush1.bf16.msra.mxu0 %v491
    %707 = vmatprep.subr.bf16.mxu0 %v522
    %708 = vmatpush2.bf16.msra.mxu0 %v521
    %709 = vmatprep.subr.bf16.mxu0 %v520
    %710 = vmatpush2.bf16.msra.mxu0 %v519
    %711 = vmatprep.subr.bf16.mxu0 %v518
    %712 = vmatpush2.bf16.msra.mxu0 %v517
    %713 = vmatprep.subr.bf16.mxu0 %v516
    %714 = vmatpush2.bf16.msra.mxu0 %v515
    %715 = vmatprep.subr.bf16.mxu0 %v514
    %716 = vmatpush2.bf16.msra.mxu0 %v513
    %717 = vmatprep.subr.bf16.mxu0 %v512
    %718 = vmatpush2.bf16.msra.mxu0 %v511
    %719 = vmatprep.subr.bf16.mxu0 %v510
    %720 = vmatpush2.bf16.msra.mxu0 %v509
    %721 = vmatprep.subr.bf16.mxu0 %v508
    %722 = vmatpush2.bf16.msra.mxu0 %v507
    %723 = vmatprep.mubr.bf16.mxu0 %v81
    %724 = vmatmul.mubr.bf16.gmra.mxu0 %v80
    %v725 = vpop.f32.mrf.mxu0
    %v726 = vadd.f32 %v190, %v725
    %v727 = vpop.f32.mrf.mxu0
    %v728 = vadd.f32 %v194, %v727
    %v729 = vpop.f32.mrf.mxu0
    %v730 = vpop.f32.mrf.mxu0
    %731 = vdwg.mxu0
    %732 = vmatprep.subr.bf16.mxu0 %v538
    %733 = vmatpush1.bf16.msra.mxu0 %v537
    %734 = vmatprep.subr.bf16.mxu0 %v536
    %735 = vmatpush1.bf16.msra.mxu0 %v535
    %736 = vmatprep.subr.bf16.mxu0 %v534
    %737 = vmatpush1.bf16.msra.mxu0 %v533
    %738 = vmatprep.subr.bf16.mxu0 %v532
    %739 = vmatpush1.bf16.msra.mxu0 %v531
    %740 = vmatprep.subr.bf16.mxu0 %v530
    %741 = vmatpush1.bf16.msra.mxu0 %v529
    %742 = vmatprep.subr.bf16.mxu0 %v528
    %743 = vmatpush1.bf16.msra.mxu0 %v527
    %744 = vmatprep.subr.bf16.mxu0 %v526
    %745 = vmatpush1.bf16.msra.mxu0 %v525
    %746 = vmatprep.subr.bf16.mxu0 %v524
    %747 = vmatpush1.bf16.msra.mxu0 %v523
    %748 = vmatprep.subr.bf16.mxu0 %v554
    %749 = vmatpush2.bf16.msra.mxu0 %v553
    %750 = vmatprep.subr.bf16.mxu0 %v552
    %751 = vmatpush2.bf16.msra.mxu0 %v551
    %752 = vmatprep.subr.bf16.mxu0 %v550
    %753 = vmatpush2.bf16.msra.mxu0 %v549
    %754 = vmatprep.subr.bf16.mxu0 %v548
    %755 = vmatpush2.bf16.msra.mxu0 %v547
    %756 = vmatprep.subr.bf16.mxu0 %v546
    %757 = vmatpush2.bf16.msra.mxu0 %v545
    %758 = vmatprep.subr.bf16.mxu0 %v544
    %759 = vmatpush2.bf16.msra.mxu0 %v543
    %760 = vmatprep.subr.bf16.mxu0 %v542
    %761 = vmatpush2.bf16.msra.mxu0 %v541
    %762 = vmatprep.subr.bf16.mxu0 %v540
    %763 = vmatpush2.bf16.msra.mxu0 %v539
    %764 = vmatprep.mubr.bf16.mxu0 %v83
    %765 = vmatmul.mubr.bf16.gmra.mxu0 %v82
    %v766 = vpop.f32.mrf.mxu0
    %v767 = vadd.f32 %v726, %v766
    %v768 = vpop.f32.mrf.mxu0
    %v769 = vadd.f32 %v728, %v768
    %v770 = vpop.f32.mrf.mxu0
    %v771 = vpop.f32.mrf.mxu0
    %772 = vdwg.mxu0
    %773 = vmatprep.subr.bf16.mxu0 %v570
    %774 = vmatpush1.bf16.msra.mxu0 %v569
    %775 = vmatprep.subr.bf16.mxu0 %v568
    %776 = vmatpush1.bf16.msra.mxu0 %v567
    %777 = vmatprep.subr.bf16.mxu0 %v566
    %778 = vmatpush1.bf16.msra.mxu0 %v565
    %779 = vmatprep.subr.bf16.mxu0 %v564
    %780 = vmatpush1.bf16.msra.mxu0 %v563
    %781 = vmatprep.subr.bf16.mxu0 %v562
    %782 = vmatpush1.bf16.msra.mxu0 %v561
    %783 = vmatprep.subr.bf16.mxu0 %v560
    %784 = vmatpush1.bf16.msra.mxu0 %v559
    %785 = vmatprep.subr.bf16.mxu0 %v558
    %786 = vmatpush1.bf16.msra.mxu0 %v557
    %787 = vmatprep.subr.bf16.mxu0 %v556
    %788 = vmatpush1.bf16.msra.mxu0 %v555
    %789 = vmatprep.subr.bf16.mxu0 %v586
    %790 = vmatpush2.bf16.msra.mxu0 %v585
    %791 = vmatprep.subr.bf16.mxu0 %v584
    %792 = vmatpush2.bf16.msra.mxu0 %v583
    %793 = vmatprep.subr.bf16.mxu0 %v582
    %794 = vmatpush2.bf16.msra.mxu0 %v581
    %795 = vmatprep.subr.bf16.mxu0 %v580
    %796 = vmatpush2.bf16.msra.mxu0 %v579
    %797 = vmatprep.subr.bf16.mxu0 %v578
    %798 = vmatpush2.bf16.msra.mxu0 %v577
    %799 = vmatprep.subr.bf16.mxu0 %v576
    %800 = vmatpush2.bf16.msra.mxu0 %v575
    %801 = vmatprep.subr.bf16.mxu0 %v574
    %802 = vmatpush2.bf16.msra.mxu0 %v573
    %803 = vmatprep.subr.bf16.mxu0 %v572
    %804 = vmatpush2.bf16.msra.mxu0 %v571
    %805 = vmatprep.mubr.bf16.mxu0 %v85
    %806 = vmatmul.mubr.bf16.gmra.mxu0 %v84
    %v807 = vpop.f32.mrf.mxu0
    %v808 = vadd.f32 %v767, %v807
    %v809 = vpop.f32.mrf.mxu0
    %v810 = vadd.f32 %v769, %v809
    %v811 = vpop.f32.mrf.mxu0
    %v812 = vpop.f32.mrf.mxu0
    %813 = vdwg.mxu0
    %814 = vmatprep.subr.bf16.mxu0 0
    %815 = vmatpush1.bf16.msra.mxu0 0
    %816 = vmatprep.subr.bf16.mxu0 0
    %817 = vmatpush1.bf16.msra.mxu0 0
    %818 = vmatprep.subr.bf16.mxu0 0
    %819 = vmatpush1.bf16.msra.mxu0 0
    %820 = vmatprep.subr.bf16.mxu0 0
    %821 = vmatpush1.bf16.msra.mxu0 0
    %822 = vmatprep.subr.bf16.mxu0 0
    %823 = vmatpush1.bf16.msra.mxu0 0
    %824 = vmatprep.subr.bf16.mxu0 0
    %825 = vmatpush1.bf16.msra.mxu0 0
    %826 = vmatprep.subr.bf16.mxu0 0
    %827 = vmatpush1.bf16.msra.mxu0 0
    %828 = vmatprep.subr.bf16.mxu0 %v588
    %829 = vmatpush1.bf16.msra.mxu0 %v587
    %830 = vmatprep.subr.bf16.mxu0 0
    %831 = vmatpush2.bf16.msra.mxu0 0
    %832 = vmatprep.subr.bf16.mxu0 0
    %833 = vmatpush2.bf16.msra.mxu0 0
    %834 = vmatprep.subr.bf16.mxu0 0
    %835 = vmatpush2.bf16.msra.mxu0 0
    %836 = vmatprep.subr.bf16.mxu0 0
    %837 = vmatpush2.bf16.msra.mxu0 0
    %838 = vmatprep.subr.bf16.mxu0 0
    %839 = vmatpush2.bf16.msra.mxu0 0
    %840 = vmatprep.subr.bf16.mxu0 0
    %841 = vmatpush2.bf16.msra.mxu0 0
    %842 = vmatprep.subr.bf16.mxu0 0
    %843 = vmatpush2.bf16.msra.mxu0 0
    %844 = vmatprep.subr.bf16.mxu0 0
    %845 = vmatpush2.bf16.msra.mxu0 0
    %846 = vmatprep.mubr.bf16.mxu0 0
    %847 = vmatmul.mubr.bf16.gmra.mxu0 %v689
    %v848 = vpop.f32.mrf.mxu0
    %v849 = vadd.f32 %v808, %v848
    %v850 = vpop.f32.mrf.mxu0
    %v851 = vadd.f32 %v810, %v850
    %v852 = vpop.f32.mrf.mxu0
    %v853 = vpop.f32.mrf.mxu0
    %854 = vdwg.mxu0
    %v855 = vmax.f32 %v849, 0.0
    %v856 = vmax.f32 %v851, 0.0
    %v857 = vpack.c.bf16 %v855, %v855
    %v858 = vpack.c.bf16 %v856, %v856
    %v861 = vcombine.low %v857, %v858
    %v863 = vunpack.c.l.s4 1966171168
    %v864 = vunpack.c.0.s8 %v863
    %v865 = vlaneseq
    %v866 = vshrl.u32 %v865, 7
    %v867 = vsub.s32 %v864, %v866
    %v868 = vrot.slane %v861, %v867
    %v870 = vunpack.c.l.s4 1966171168
    %v871 = vunpack.c.0.s8 %v870
    %v872 = vlaneseq
    %v873 = vshrl.u32 %v872, 7
    %v874 = vsub.s32 %v871, %v873
    %v875 = vrot.slane %v868, %v874
    %877 = vst [vmem:[#allocation2] sm:$0x3] %v875
    %v878 = vld [vmem:[#allocation2] sm:$0x3]
    %v879 = vld [vmem:[%s3] sm:$0xf]
    %v880 = vld [vmem:[%s3 + $0x4] sm:$0xf]
    %v881 = vld [vmem:[%s3 + $0x8] sm:$0xf]
    %v882 = vld [vmem:[%s3 + $0xc] sm:$0xf]
    %v883 = vld [vmem:[%s3 + $0x10] sm:$0xf]
    %v884 = vld [vmem:[%s3 + $0x14] sm:$0xf]
    %v885 = vld [vmem:[%s3 + $0x18] sm:$0xf]
    %v886 = vld [vmem:[%s3 + $0x1c] sm:$0xf]
    %v887 = vld [vmem:[%s3 + $0x20] sm:$0xf]
    %v888 = vld [vmem:[%s3 + $0x24] sm:$0xf]
    %v889 = vld [vmem:[%s3 + $0x28] sm:$0xf]
    %v890 = vld [vmem:[%s3 + $0x2c] sm:$0xf]
    %v891 = vld [vmem:[%s3 + $0x30] sm:$0xf]
    %v892 = vld [vmem:[%s3 + $0x34] sm:$0xf]
    %v893 = vld [vmem:[%s3 + $0x38] sm:$0xf]
    %v894 = vld [vmem:[%s3 + $0x3c] sm:$0xf]
    %v895 = vld [vmem:[%s3 + $0x40] sm:$0xf]
    %v896 = vld [vmem:[%s3 + $0x44] sm:$0xf]
    %v897 = vld [vmem:[%s3 + $0x48] sm:$0xf]
    %v898 = vld [vmem:[%s3 + $0x4c] sm:$0xf]
    %v899 = vld [vmem:[%s3 + $0x50] sm:$0xf]
    %v900 = vld [vmem:[%s3 + $0x54] sm:$0xf]
    %v901 = vld [vmem:[%s3 + $0x58] sm:$0xf]
    %v902 = vld [vmem:[%s3 + $0x5c] sm:$0xf]
    %v903 = vld [vmem:[%s3 + $0x60] sm:$0xf]
    %v904 = vld [vmem:[%s3 + $0x64] sm:$0xf]
    %v905 = vld [vmem:[%s3 + $0x68] sm:$0xf]
    %v906 = vld [vmem:[%s3 + $0x6c] sm:$0xf]
    %v907 = vld [vmem:[%s3 + $0x70] sm:$0xf]
    %v908 = vld [vmem:[%s3 + $0x74] sm:$0xf]
    %v909 = vld [vmem:[%s3 + $0x78] sm:$0xf]
    %v910 = vld [vmem:[%s3 + $0x7c] sm:$0xf]
    %v911 = vld [vmem:[%s4] sm:$0x1]
    %v913 = vlaneseq
    %v914 = vshrl.u32 %v913, 7
    %v915 = vsub.s32 0, %v914
    %v916 = vrot.slane %v911, %v915
    %v920 = vunpack.c.l.s4 1966171168
    %v921 = vunpack.c.0.s8 %v920
    %v922 = vlaneseq
    %v923 = vshrl.u32 %v922, 7
    %v924 = vsub.s32 %v921, %v923
    %v925 = vrot.slane %v878, %v924
    %v926 = vcombine.high %v925, %v925
    %v928 = vunpack.c.l.s4 1966171168
    %v929 = vunpack.c.0.s8 %v928
    %v930 = vlaneseq
    %v931 = vshrl.u32 %v930, 7
    %v932 = vsub.s32 %v929, %v931
    %v933 = vrot.slane %v925, %v932
    %v935 = vunpack.c.l.s4 1966171168
    %v936 = vunpack.c.0.s8 %v935
    %v937 = vlaneseq
    %v938 = vshrl.u32 %v937, 7
    %v939 = vsub.s32 %v936, %v938
    %v940 = vrot.slane %v926, %v939
    %v975 = vunpack.c.l.b16 %v879
    %v976 = vunpack.c.l.b16 %v880
    %v977 = vunpack.c.l.b16 %v881
    %v978 = vunpack.c.l.b16 %v882
    %v979 = vunpack.c.l.b16 %v883
    %v980 = vunpack.c.l.b16 %v884
    %v981 = vunpack.c.l.b16 %v885
    %v982 = vunpack.c.l.b16 %v886
    %v983 = vunpack.c.l.b16 %v887
    %v984 = vunpack.c.l.b16 %v888
    %v985 = vunpack.c.l.b16 %v889
    %v986 = vunpack.c.l.b16 %v890
    %v987 = vunpack.c.l.b16 %v891
    %v988 = vunpack.c.l.b16 %v892
    %v989 = vunpack.c.l.b16 %v893
    %v990 = vunpack.c.l.b16 %v894
    %v991 = vunpack.c.l.b16 %v895
    %v992 = vunpack.c.l.b16 %v896
    %v993 = vunpack.c.l.b16 %v897
    %v994 = vunpack.c.l.b16 %v898
    %v995 = vunpack.c.l.b16 %v899
    %v996 = vunpack.c.l.b16 %v900
    %v997 = vunpack.c.l.b16 %v901
    %v998 = vunpack.c.l.b16 %v902
    %v999 = vunpack.c.l.b16 %v903
    %v1000 = vunpack.c.l.b16 %v904
    %v1001 = vunpack.c.l.b16 %v905
    %v1002 = vunpack.c.l.b16 %v906
    %v1003 = vunpack.c.l.b16 %v907
    %v1004 = vunpack.c.l.b16 %v908
    %v1005 = vunpack.c.l.b16 %v909
    %v1006 = vunpack.c.l.b16 %v910
    %v1007 = vpack.c.b16 %v976, %v975
    %v1008 = vpack.c.b16 %v978, %v977
    %v1009 = vpack.c.b16 %v980, %v979
    %v1010 = vpack.c.b16 %v982, %v981
    %v1011 = vpack.c.b16 %v984, %v983
    %v1012 = vpack.c.b16 %v986, %v985
    %v1013 = vpack.c.b16 %v988, %v987
    %v1014 = vpack.c.b16 %v990, %v989
    %v1015 = vpack.c.b16 %v992, %v991
    %v1016 = vpack.c.b16 %v994, %v993
    %v1017 = vpack.c.b16 %v996, %v995
    %v1018 = vpack.c.b16 %v998, %v997
    %v1019 = vpack.c.b16 %v1000, %v999
    %v1020 = vpack.c.b16 %v1002, %v1001
    %v1021 = vpack.c.b16 %v1004, %v1003
    %v1022 = vpack.c.b16 %v1006, %v1005
    %1039 = vmatprep.subr.bf16.mxu0 0
    %1040 = vmatpush1.bf16.msra.mxu0 %v1014
    %1041 = vmatprep.subr.bf16.mxu0 0
    %1042 = vmatpush1.bf16.msra.mxu0 %v1013
    %1043 = vmatprep.subr.bf16.mxu0 0
    %1044 = vmatpush1.bf16.msra.mxu0 %v1012
    %1045 = vmatprep.subr.bf16.mxu0 0
    %1046 = vmatpush1.bf16.msra.mxu0 %v1011
    %1047 = vmatprep.subr.bf16.mxu0 0
    %1048 = vmatpush1.bf16.msra.mxu0 %v1010
    %1049 = vmatprep.subr.bf16.mxu0 0
    %1050 = vmatpush1.bf16.msra.mxu0 %v1009
    %1051 = vmatprep.subr.bf16.mxu0 0
    %1052 = vmatpush1.bf16.msra.mxu0 %v1008
    %1053 = vmatprep.subr.bf16.mxu0 0
    %1054 = vmatpush1.bf16.msra.mxu0 %v1007
    %1055 = vmatprep.subr.bf16.mxu0 0
    %1056 = vmatpush2.bf16.msra.mxu0 %v1022
    %1057 = vmatprep.subr.bf16.mxu0 0
    %1058 = vmatpush2.bf16.msra.mxu0 %v1021
    %1059 = vmatprep.subr.bf16.mxu0 0
    %1060 = vmatpush2.bf16.msra.mxu0 %v1020
    %1061 = vmatprep.subr.bf16.mxu0 0
    %1062 = vmatpush2.bf16.msra.mxu0 %v1019
    %1063 = vmatprep.subr.bf16.mxu0 0
    %1064 = vmatpush2.bf16.msra.mxu0 %v1018
    %1065 = vmatprep.subr.bf16.mxu0 0
    %1066 = vmatpush2.bf16.msra.mxu0 %v1017
    %1067 = vmatprep.subr.bf16.mxu0 0
    %1068 = vmatpush2.bf16.msra.mxu0 %v1016
    %1069 = vmatprep.subr.bf16.mxu0 0
    %1070 = vmatpush2.bf16.msra.mxu0 %v1015
    %1071 = vmatprep.mubr.bf16.mxu0 %v940
    %1072 = vmatmul.mubr.bf16.gmra.mxu0 %v933
    %v1073 = vpop.f32.mrf.mxu0
    %v1074 = vadd.f32 %v916, %v1073
    %v1075 = vpop.f32.mrf.mxu0
    %v1076 = vpop.f32.mrf.mxu0
    %v1077 = vpop.f32.mrf.mxu0
    %1078 = vdwg.mxu0
    %vm1079 = vcmask 74752
    %1080 = vst.msk [vmem:[#allocation6] sm:$0x3] %vm1079, %v1074
    // Predicated region
    $region26: #{tpu_custom_call.1} parent=1 // pred_check
      _
    $region27: #{tpu_custom_call.1} parent=1 // pred_check_branch
      %1082 = sbr.rel (0) target = $region29
    $region28: #{tpu_custom_call.1} parent=1 // pred_region
      %s1084 = ssub.s32 32, 32
      %1085 = vsyncadd [#allocation5], %s1084
      %s1087 = sshll.u32 [#allocation6], 4
      %s1088 = int_to_ptr.vmem [resolvable:$true] %s1087
      %1090 = dma.vmem_to_hbm [thread:$0]  %s1088, 32, %s5, [#allocation5]
    $region29: #{tpu_custom_call.1} parent=1 // pred_fallthru
      _
    // Predicated region
    $region30: #{tpu_custom_call.1} parent=1 // pred_check
      _
    $region31: #{tpu_custom_call.1} parent=1 // pred_check_branch
      %1092 = sbr.rel (0) target = $region33
    $region32: #{tpu_custom_call.1} parent=1 // pred_region
      %1093 = dma.done [#allocation5], 32
    $region33: #{tpu_custom_call.1} parent=1 // pred_fallthru
      _
    %1094 = vsyncpa [#allocation4], 1
    %1095 = vsyncpa [#allocation5], 1

</llo_original>
